<compile_context>
chip_gen: v6e
topology: v6e:2x2x1
jax: 0.10.0
libtpu: 0.0.40
codegen_flags: <defaults>
</compile_context>

<pallas_src>
import functools

import jax
import jax.numpy as jnp
from jax.experimental import pallas as pl
from jax.experimental.pallas import tpu as pltpu


def _strip_kernel(imgs_ref, ov_ref, w_ref, b_ref, out_ref, acc_ref, *,
                  alpha, beta, n):
    """STRIP kernel.  grid = (B_pad//TB ["parallel"], D_pad//tk ["arbitrary"]).

    imgs_ref : (TB, tk)     bf16  K-slice of one batch tile of flattened images
    ov_ref   : (n, tk)      bf16  K-slice of the overlay images data[idx]
    w_ref    : (tk, CPAD)   bf16  K-slice of the classifier weight (class-padded)
    b_ref    : (1, CPAD)    f32   classifier bias; padded class lanes are -1e30
    out_ref  : (TB, CPAD)   f32   mean entropy per image, broadcast across lanes
    acc_ref  : (TB*n, CPAD) f32   logits accumulator (scratch, resident over K)
    """
    k = pl.program_id(1)
    tb = imgs_ref.shape[0]
    tk = imgs_ref.shape[1]
    cpad = w_ref.shape[1]

    @pl.when(k == 0)
    def _init():
        acc_ref[...] = jnp.zeros_like(acc_ref)

    # ---- blend this batch tile with all n overlays for this K-slice --------
    # Fused bf16 broadcast + scale + add + clip: a single (TB*n, tk) bf16 LHS,
    # no separate f32 intermediate, no second cast pass.
    img = imgs_ref[...]                                        # (TB, tk) bf16
    ov = ov_ref[...]                                           # (n,  tk) bf16
    xa = img if alpha == 1.0 else alpha * img                  # stays bf16
    xb = ov if beta == 1.0 else beta * ov                      # stays bf16
    x = jnp.clip(xa[:, None, :] + xb[None, :, :], 0.0, 1.0)    # (TB, n, tk)
    x = x.reshape(tb * n, tk)                                  # (TB*n, tk) bf16

    # ---- one batched MXU matmul: bf16 operands, f32 accumulation -----------
    acc_ref[...] += jnp.dot(x, w_ref[...],
                            preferred_element_type=jnp.float32)

    # ---- epilogue on the last K-tile: softmax entropy + per-image mean -----
    @pl.when(k == pl.num_programs(1) - 1)
    def _finalize():
        # acc for padded class columns is exactly 0 (zero weight columns), so
        # the -1e30 baked into the padded bias lanes masks them: exp -> 0 and
        # 0 * finite -> 0 in the e*sh term (do NOT use -inf here).
        logits = acc_ref[...] + b_ref[...]                     # (TB*n, CPAD)

        m = jnp.max(logits, axis=-1, keepdims=True)            # (TB*n, 1)
        sh = logits - m
        e = jnp.exp(sh)                                        # padded cols -> 0
        denom = jnp.sum(e, axis=-1, keepdims=True)             # (TB*n, 1)
        s = jnp.sum(e * sh, axis=-1, keepdims=True)            # (TB*n, 1)
        # H = -sum(p*log p) = log(denom) - (1/denom) * sum(e * (logits - m))
        ent = jnp.log(denom) - pl.reciprocal(denom, approx=True) * s

        # per-image mean over the n blends: lane-broadcast, pure sublane-split
        # reshape, then a cheap group reduce (no sublane->lane relayout, no
        # O(B^2*n) selection matmul).
        ent_b = jnp.broadcast_to(ent, (tb * n, cpad))          # (TB*n, CPAD)
        out_ref[...] = jnp.mean(ent_b.reshape(tb, n, cpad), axis=1)  # (TB, CPAD)


def strip_detection(imgs, data, w, bias, *, alpha=1.0, beta=1.0, n=16,
                    key=None, tk_target=1024):
    """JAX wrapper mirroring STRIP_Detection.forward.

    imgs : (B, C, H, W) float32 in [0, 1]
    data : (N, C, H, W) float32 in [0, 1]   (clean dataset)
    w    : (C*H*W, num_classes) classifier weight
    bias : (num_classes,)       classifier bias
    returns (B,) float32 mean entropies
    """
    if key is None:
        key = jax.random.PRNGKey(42)

    B = imgs.shape[0]
    D = imgs.shape[1] * imgs.shape[2] * imgs.shape[3]
    num_classes = w.shape[1]
    CPAD = max(128, pl.cdiv(num_classes, 128) * 128)

    # idx = np.random.randint(0, data.shape[0], size=n)  -> jax.random equivalent
    idx = jax.random.randint(key, (n,), 0, data.shape[0])
    overlays = data[idx].reshape(n, D)
    imgs_flat = imgs.reshape(B, D)

    # ---- K tiling: multiples of 128, pad the feature dim so it divides -----
    tk = max(128, min(tk_target, pl.cdiv(D, 128) * 128))
    tk = (tk // 128) * 128
    D_pad = pl.cdiv(D, tk) * tk
    nk = D_pad // tk

    # ---- B tiling: TB multiple of 8 with TB*n >= ~256 (or TB == B if small) -
    tb_target = max(8, ((pl.cdiv(256, n) + 7) // 8) * 8)
    if B <= tb_target:
        TB, B_pad = B, B            # single b-tile; full-dim block is allowed
    else:
        TB = tb_target
        B_pad = pl.cdiv(B, TB) * TB
    nb = B_pad // TB

    def pad2(x, rows, cols, dtype):
        out = jnp.zeros((rows, cols), dtype)
        return out.at[:x.shape[0], :x.shape[1]].set(x.astype(dtype))

    # imgs / overlays shipped as bf16 (halves HBM->VMEM DMA; blend runs bf16).
    imgs_p = pad2(imgs_flat, B_pad, D_pad, jnp.bfloat16)
    ov_p = pad2(overlays, n, D_pad, jnp.bfloat16)
    # weight shipped as bf16; zero rows for padded features and zero columns
    # for padded classes contribute nothing to the f32 accumulation.
    w_pad = pad2(w, D_pad, CPAD, jnp.bfloat16)
    # class-padding mask baked into the bias: padded lanes -> -1e30 (finite!).
    b_pad = jnp.full((1, CPAD), -1e30, jnp.float32).at[0, :num_classes].set(
        bias.astype(jnp.float32))

    kernel = functools.partial(_strip_kernel, alpha=float(alpha),
                               beta=float(beta), n=n)

    # scoped-VMEM sizing: double-buffered inputs/outputs + resident acc
    # + blend LHS + epilogue temps; floor 32 MiB, cap 48 MiB (v7x-safe).
    in_bytes = 2 * (TB * tk * 2 + n * tk * 2 + tk * CPAD * 2 + CPAD * 4)
    out_bytes = 2 * TB * CPAD * 4
    acc_bytes = TB * n * CPAD * 4
    tmp_bytes = 2 * TB * n * tk * 2 + 6 * TB * n * CPAD * 4
    vmem_limit = int(min(max(2 * (in_bytes + out_bytes + acc_bytes + tmp_bytes),
                             32 * 1024 * 1024), 48 * 1024 * 1024))

    # TODO(synk): for very small D the K-streamed weight is re-fetched once per
    # b-tile; a resident full-weight BlockSpec would remove that redundant DMA.
    out = pl.pallas_call(
        kernel,
        out_shape=jax.ShapeDtypeStruct((B_pad, CPAD), jnp.float32),
        grid_spec=pltpu.PrefetchScalarGridSpec(
            num_scalar_prefetch=0,
            grid=(nb, nk),
            in_specs=[
                pl.BlockSpec((TB, tk), lambda b, k: (b, k)),      # imgs tile
                pl.BlockSpec((n, tk), lambda b, k: (0, k)),       # overlays
                pl.BlockSpec((tk, CPAD), lambda b, k: (k, 0)),    # weight
                pl.BlockSpec((1, CPAD), lambda b, k: (0, 0)),     # bias
            ],
            out_specs=pl.BlockSpec((TB, CPAD), lambda b, k: (b, 0)),
            scratch_shapes=[pltpu.VMEM((TB * n, CPAD), jnp.float32)],
        ),
        compiler_params=pltpu.CompilerParams(
            dimension_semantics=("parallel", "arbitrary"),
            vmem_limit_bytes=vmem_limit,
        ),
    )(imgs_p, ov_p, w_pad, b_pad)

    # scalar per image was broadcast across lanes; take lane 0, drop B padding
    return out[:B, 0]


def _strip_reference(imgs_flat, overlays, w, bias, alpha, beta):
    """Pure-JAX reference (f32) of the same forward pass."""
    x = jnp.clip(alpha * imgs_flat[:, None, :] + beta * overlays[None, :, :],
                 0.0, 1.0)                                     # (B, n, D)
    logits = jnp.einsum('bnd,dc->bnc', x, w) + bias
    p = jax.nn.softmax(logits, axis=-1)
    ent = -jnp.sum(p * jnp.log(p), axis=-1)                    # (B, n)
    return ent.mean(axis=1)


if __name__ == "__main__":
    # small shapes consistent with the module: batch=2, channels=4, spatial=16
    B, C, H, W = 2, 4, 16, 16
    N_DATA = 32
    NUM_CLASSES = 10
    N_BLENDS = 16          # module default n=100; small n for the synthetic run
    D = C * H * W

    key = jax.random.PRNGKey(0)
    k_img, k_data, k_w, k_b, k_idx = jax.random.split(key, 5)

    imgs = jax.random.uniform(k_img, (B, C, H, W), jnp.float32)    # in [0,1]
    data = jax.random.uniform(k_data, (N_DATA, C, H, W), jnp.float32)

    # TODO(synk): the original forward takes an arbitrary nn.Module `model`;
    # a deterministic linear classifier over flattened pixels is substituted so
    # the blend + matmul + softmax-entropy hot path lives in-kernel.
    w = 0.05 * jax.random.normal(k_w, (D, NUM_CLASSES), jnp.float32)
    bias = 0.01 * jax.random.normal(k_b, (NUM_CLASSES,), jnp.float32)

    h = strip_detection(imgs, data, w, bias,
                        alpha=1.0, beta=1.0, n=N_BLENDS, key=k_idx)
    h = jax.block_until_ready(h)

    assert h.shape == (B,) and h.dtype == jnp.float32
    assert bool(jnp.all(jnp.isfinite(h)))

    # correctness check against a pure-JAX f32 reference (same overlay draw)
    idx = jax.random.randint(k_idx, (N_BLENDS,), 0, N_DATA)
    overlays = data[idx].reshape(N_BLENDS, D)
    h_ref = _strip_reference(imgs.reshape(B, D), overlays, w, bias, 1.0, 1.0)
    assert bool(jnp.allclose(h, h_ref, rtol=3e-2, atol=3e-2))

    print("KERNEL_OK")
</pallas_src>

<mosaic_0001>
module attributes {stable_mosaic.version = 11 : i64} {
  func.func @_strip_kernel(%arg0: i32, %arg1: i32, %arg2: memref<2x1024xbf16, #tpu.memory_space<vmem>>, %arg3: memref<16x1024xbf16, #tpu.memory_space<vmem>>, %arg4: memref<1024x128xbf16, #tpu.memory_space<vmem>>, %arg5: memref<1x128xf32, #tpu.memory_space<vmem>>, %arg6: memref<2x128xf32, #tpu.memory_space<vmem>>, %arg7: memref<32x128xf32, #tpu.memory_space<vmem>>) attributes {dimension_semantics = [#tpu.dimension_semantics<parallel>, #tpu.dimension_semantics<arbitrary>], iteration_bounds = array<i64: 1, 1>, scalar_prefetch = 0 : i64, scratch_operands = 1 : i64, tpu.core_type = #tpu.core_type<tc>, window_params = [{transform_indices = @transform_0, window_bounds = array<i64: 2, 1024>}, {transform_indices = @transform_1, window_bounds = array<i64: 16, 1024>}, {transform_indices = @transform_2, window_bounds = array<i64: 1024, 128>}, {pipeline_mode = #tpu.pipeline_mode<synchronous>, transform_indices = @transform_3, window_bounds = array<i64: 1, 128>}, {transform_indices = @transform_4, window_bounds = array<i64: 2, 128>}]} {
    %c0_i32 = arith.constant 0 : i32
    %0 = arith.cmpi eq, %arg1, %c0_i32 : i32
    %1 = arith.extui %0 : i1 to i32
    %c0_i32_0 = arith.constant 0 : i32
    %2 = arith.cmpi ne, %1, %c0_i32_0 : i32
    scf.if %2 {
      %cst_14 = arith.constant 0.000000e+00 : f32
      %25 = vector.broadcast %cst_14 : f32 to vector<32x128xf32>
      %c0_15 = arith.constant 0 : index
      %c0_16 = arith.constant 0 : index
      %26 = vector.load %arg7[%c0_15, %c0_16] : memref<32x128xf32, #tpu.memory_space<vmem>>, vector<32x128xf32>
      tpu.vector_store %arg7[%c0_15, %c0_16], %25 {strides = array<i32>} : memref<32x128xf32, #tpu.memory_space<vmem>>, vector<32x128xf32>,
    } else {
    }
    %c0 = arith.constant 0 : index
    %c0_1 = arith.constant 0 : index
    %3 = vector.load %arg2[%c0, %c0_1] : memref<2x1024xbf16, #tpu.memory_space<vmem>>, vector<2x1024xbf16>
    %c0_2 = arith.constant 0 : index
    %c0_3 = arith.constant 0 : index
    %4 = vector.load %arg3[%c0_2, %c0_3] : memref<16x1024xbf16, #tpu.memory_space<vmem>>, vector<16x1024xbf16>
    %5 = vector.shape_cast %3 : vector<2x1024xbf16> to vector<2x1x1024xbf16>
    %6 = vector.shape_cast %4 : vector<16x1024xbf16> to vector<1x16x1024xbf16>
    %7 = vector.broadcast %5 : vector<2x1x1024xbf16> to vector<2x16x1024xbf16>
    %8 = vector.broadcast %6 : vector<1x16x1024xbf16> to vector<2x16x1024xbf16>
    %9 = arith.addf %7, %8 : vector<2x16x1024xbf16>
    %cst = arith.constant 0.000000e+00 : f32
    %cst_4 = arith.constant 1.000000e+00 : f32
    %10 = arith.truncf %cst : f32 to bf16
    %11 = vector.broadcast %10 : bf16 to vector<2x16x1024xbf16>
    %12 = arith.maximumf %11, %9 : vector<2x16x1024xbf16>
    %13 = arith.truncf %cst_4 : f32 to bf16
    %14 = vector.broadcast %13 : bf16 to vector<2x16x1024xbf16>
    %15 = arith.minimumf %14, %12 : vector<2x16x1024xbf16>
    %16 = vector.shape_cast %15 : vector<2x16x1024xbf16> to vector<32x1024xbf16>
    %c0_5 = arith.constant 0 : index
    %c0_6 = arith.constant 0 : index
    %17 = vector.load %arg7[%c0_5, %c0_6] : memref<32x128xf32, #tpu.memory_space<vmem>>, vector<32x128xf32>
    %c0_7 = arith.constant 0 : index
    %c0_8 = arith.constant 0 : index
    %18 = vector.load %arg4[%c0_7, %c0_8] : memref<1024x128xbf16, #tpu.memory_space<vmem>>, vector<1024x128xbf16>
    %cst_9 = arith.constant dense<0.000000e+00> : vector<32x128xf32>
    %19 = tpu.matmul %16, %18, %cst_9 {dimension_numbers = #tpu.dot_dimension_numbers<[1], [0], [0], [1], [0, 0, 1, 1], [], []>} : vector<32x1024xbf16>, vector<1024x128xbf16>, vector<32x128xf32> -> vector<32x128xf32>
    %20 = arith.addf %17, %19 : vector<32x128xf32>
    %c0_10 = arith.constant 0 : index
    %c0_11 = arith.constant 0 : index
    %21 = vector.load %arg7[%c0_10, %c0_11] : memref<32x128xf32, #tpu.memory_space<vmem>>, vector<32x128xf32>
    tpu.vector_store %arg7[%c0_10, %c0_11], %20 {strides = array<i32>} : memref<32x128xf32, #tpu.memory_space<vmem>>, vector<32x128xf32>,
    %c0_i32_12 = arith.constant 0 : i32
    %22 = arith.cmpi eq, %arg1, %c0_i32_12 : i32
    %23 = arith.extui %22 : i1 to i32
    %c0_i32_13 = arith.constant 0 : i32
    %24 = arith.cmpi ne, %23, %c0_i32_13 : i32
    scf.if %24 {
      %c0_14 = arith.constant 0 : index
      %c0_15 = arith.constant 0 : index
      %25 = vector.load %arg7[%c0_14, %c0_15] : memref<32x128xf32, #tpu.memory_space<vmem>>, vector<32x128xf32>
      %c0_16 = arith.constant 0 : index
      %c0_17 = arith.constant 0 : index
      %26 = vector.load %arg5[%c0_16, %c0_17] : memref<1x128xf32, #tpu.memory_space<vmem>>, vector<1x128xf32>
      %27 = vector.broadcast %26 : vector<1x128xf32> to vector<32x128xf32>
      %28 = arith.addf %25, %27 : vector<32x128xf32>
      %cst_18 = arith.constant dense<0xFF800000> : vector<32xf32>
      %29 = vector.multi_reduction <maximumf>, %28, %cst_18 [1] : vector<32x128xf32> to vector<32xf32>
      %30 = vector.shape_cast %29 : vector<32xf32> to vector<32x1xf32>
      %31 = vector.broadcast %30 : vector<32x1xf32> to vector<32x128xf32>
      %32 = arith.subf %28, %31 : vector<32x128xf32>
      %33 = math.exp %32 : vector<32x128xf32>
      %cst_19 = arith.constant dense<0.000000e+00> : vector<32xf32>
      %34 = vector.multi_reduction <add>, %33, %cst_19 [1] : vector<32x128xf32> to vector<32xf32>
      %35 = vector.shape_cast %34 : vector<32xf32> to vector<32x1xf32>
      %36 = arith.mulf %33, %32 : vector<32x128xf32>
      %cst_20 = arith.constant dense<0.000000e+00> : vector<32xf32>
      %37 = vector.multi_reduction <add>, %36, %cst_20 [1] : vector<32x128xf32> to vector<32xf32>
      %38 = vector.shape_cast %37 : vector<32xf32> to vector<32x1xf32>
      %39 = math.log %35 : vector<32x1xf32>
      %40 = tpu.reciprocal %35 {approx = true} : vector<32x1xf32> -> vector<32x1xf32>
      %41 = arith.mulf %40, %38 : vector<32x1xf32>
      %42 = arith.subf %39, %41 : vector<32x1xf32>
      %43 = vector.shape_cast %42 : vector<32x1xf32> to vector<32x1xf32>
      %44 = vector.broadcast %43 : vector<32x1xf32> to vector<32x128xf32>
      %45 = vector.shape_cast %44 : vector<32x128xf32> to vector<2x16x128xf32>
      %cst_21 = arith.constant dense<0.000000e+00> : vector<2x128xf32>
      %46 = vector.multi_reduction <add>, %45, %cst_21 [1] : vector<2x16x128xf32> to vector<2x128xf32>
      %cst_22 = arith.constant 1.600000e+01 : f32
      %47 = vector.broadcast %cst_22 : f32 to vector<2x128xf32>
      %48 = arith.divf %46, %47 : vector<2x128xf32>
      %c0_23 = arith.constant 0 : index
      %c0_24 = arith.constant 0 : index
      %49 = vector.load %arg6[%c0_23, %c0_24] : memref<2x128xf32, #tpu.memory_space<vmem>>, vector<2x128xf32>
      tpu.vector_store %arg6[%c0_23, %c0_24], %48 {strides = array<i32>} : memref<2x128xf32, #tpu.memory_space<vmem>>, vector<2x128xf32>,
    } else {
    }
    return
  }
  func.func @transform_0(%arg0: i32, %arg1: i32) -> (i32, i32) {
    %c0_i32 = arith.constant 0 : i32
    return %arg0, %arg1 : i32, i32
  }
  func.func @transform_1(%arg0: i32, %arg1: i32) -> (i32, i32) {
    %c0_i32 = arith.constant 0 : i32
    %c0_i32_0 = arith.constant 0 : i32
    return %c0_i32, %arg1 : i32, i32
  }
  func.func @transform_2(%arg0: i32, %arg1: i32) -> (i32, i32) {
    %c0_i32 = arith.constant 0 : i32
    %c0_i32_0 = arith.constant 0 : i32
    return %arg1, %c0_i32 : i32, i32
  }
  func.func @transform_3(%arg0: i32, %arg1: i32) -> (i32, i32) {
    %c0_i32 = arith.constant 0 : i32
    %c0_i32_0 = arith.constant 0 : i32
    %c0_i32_1 = arith.constant 0 : i32
    return %c0_i32, %c0_i32_0 : i32, i32
  }
  func.func @transform_4(%arg0: i32, %arg1: i32) -> (i32, i32) {
    %c0_i32 = arith.constant 0 : i32
    %c0_i32_0 = arith.constant 0 : i32
    return %arg0, %c0_i32 : i32, i32
  }
}

</mosaic_0001>

<llo_original>
// kernel: tpu_custom_call.1
$region0: #{tpu_custom_call.1}
  #allocation0 [shape = 'u32[]', space=smem, size = 0x4, offset = 0x4, fixed_abs, tag = 'smem constant byte address 0x4 - core index']
  #allocation1 [shape = 'u32[144,128]{1,0:T(1,128)}', space=vmem, size = 0x12000, scoped, tag = 'internal scratch']
  #allocation2 [shape = 'f32[32,128]{1,0:T(8,128)}', space=vmem, size = 0x4000, scoped, tag = 'scratch operand']
  %s0 = inlined_call_operand.hbm [shape: bf16[2,1024], index: 0, kind: input, shape index: {}]
  %s1 = inlined_call_operand.hbm [shape: bf16[16,1024], index: 1, kind: input, shape index: {}]
  %s2 = inlined_call_operand.hbm [shape: bf16[1024,128], index: 2, kind: input, shape index: {}]
  %s3 = inlined_call_operand.vmem [shape: f32[1,128], index: 3, kind: input, shape index: {}]
  %s4 = inlined_call_operand.hbm [shape: f32[2,128], index: 4, kind: output, shape index: {}]
  %s5 = sld [smem:[#allocation0]]
  $region46: #{tpu_custom_call.1} parent=0
    _
  %s7 = ssub.s32 1, %s5
  %s8 = scalar_select 0, %s7, %s5
  $region1: #{tpu_custom_call.1} parent=0
    #allocation3 [shape = 'u8[4096]{0}', space=vmem, size = 0x1000, scoped, tag = 'input window, operand 0, single buffered']
    #allocation4 [shape = 's32[1]{0}', space=sflag, size = 0x4, scoped, tag = 'scoped memory for tpu_custom_call.1']
    #allocation5 [shape = 's32[1]{0}', space=sflag, size = 0x4, scoped, tag = 'scoped memory for tpu_custom_call.1']
    #allocation6 [shape = 'u8[32768]{0}', space=vmem, size = 0x8000, scoped, tag = 'input window, operand 1, single buffered']
    #allocation7 [shape = 's32[1]{0}', space=sflag, size = 0x4, scoped, tag = 'scoped memory for tpu_custom_call.1']
    #allocation8 [shape = 'u8[262144]{0}', space=vmem, size = 0x40000, scoped, tag = 'input window, operand 2, single buffered']
    #allocation9 [shape = 'u8[1024]{0}', space=vmem, size = 0x400, scoped, tag = 'output window, operand 0, single buffered']
    %9 = vsyncpa [#allocation4], 0
    %10 = vsyncpa [#allocation7], 0
    %11 = vsyncpa [#allocation5], 0
    // Predicated region
    $region2: #{tpu_custom_call.1} parent=1 // pred_check
      _
    $region3: #{tpu_custom_call.1} parent=1 // pred_check_branch
      %13 = sbr.rel (0) target = $region5
    $region4: #{tpu_custom_call.1} parent=1 // pred_region
      %s15 = ssub.s32 128, 128
      %16 = vsyncadd [#allocation4], %s15
      %s18 = sshll.u32 [#allocation3], 4
      %s19 = int_to_ptr.vmem [resolvable:$true] %s18
      %21 = dma.hbm_to_vmem [thread:$0]  %s0, 128, %s19, [#allocation4]
    $region5: #{tpu_custom_call.1} parent=1 // pred_fallthru
      _
    // Predicated region
    $region6: #{tpu_custom_call.1} parent=1 // pred_check
      _
    $region7: #{tpu_custom_call.1} parent=1 // pred_check_branch
      %23 = sbr.rel (0) target = $region9
    $region8: #{tpu_custom_call.1} parent=1 // pred_region
      %s25 = ssub.s32 1024, 1024
      %26 = vsyncadd [#allocation7], %s25
      %s27 = sshll.u32 [#allocation6], 4
      %s28 = int_to_ptr.vmem [resolvable:$true] %s27
      %33 = dma.hbm_to_vmem [thread:$0]  %s1, 1024, %s28, [#allocation7], 512, 512, 32
    $region9: #{tpu_custom_call.1} parent=1 // pred_fallthru
      _
    // Predicated region
    $region10: #{tpu_custom_call.1} parent=1 // pred_check
      _
    $region11: #{tpu_custom_call.1} parent=1 // pred_check_branch
      %35 = sbr.rel (0) target = $region13
    $region12: #{tpu_custom_call.1} parent=1 // pred_region
      %s37 = ssub.s32 8192, 8192
      %38 = vsyncadd [#allocation7], %s37
      %s39 = sshll.u32 [#allocation8], 4
      %s40 = int_to_ptr.vmem [resolvable:$true] %s39
      %45 = dma.hbm_to_vmem [thread:$0]  %s2, 8192, %s40, [#allocation7], 64, 64, 4
    $region13: #{tpu_custom_call.1} parent=1 // pred_fallthru
      _
    // Predicated region
    $region14: #{tpu_custom_call.1} parent=1 // pred_check
      _
    $region15: #{tpu_custom_call.1} parent=1 // pred_check_branch
      %47 = sbr.rel (0) target = $region17
    $region16: #{tpu_custom_call.1} parent=1 // pred_region
      _
    $region17: #{tpu_custom_call.1} parent=1 // pred_fallthru
      _
    // Predicated region
    $region18: #{tpu_custom_call.1} parent=1 // pred_check
      _
    $region19: #{tpu_custom_call.1} parent=1 // pred_check_branch
      %49 = sbr.rel (0) target = $region21
    $region20: #{tpu_custom_call.1} parent=1 // pred_region
      %50 = dma.done [#allocation4], 128
    $region21: #{tpu_custom_call.1} parent=1 // pred_fallthru
      _
    // Predicated region
    $region22: #{tpu_custom_call.1} parent=1 // pred_check
      _
    $region23: #{tpu_custom_call.1} parent=1 // pred_check_branch
      %52 = sbr.rel (0) target = $region25
    $region24: #{tpu_custom_call.1} parent=1 // pred_region
      %53 = dma.done [#allocation7], 1024
    $region25: #{tpu_custom_call.1} parent=1 // pred_fallthru
      _
    // Predicated region
    $region26: #{tpu_custom_call.1} parent=1 // pred_check
      _
    $region27: #{tpu_custom_call.1} parent=1 // pred_check_branch
      %55 = sbr.rel (0) target = $region29
    $region28: #{tpu_custom_call.1} parent=1 // pred_region
      %56 = dma.done [#allocation7], 8192
    $region29: #{tpu_custom_call.1} parent=1 // pred_fallthru
      _
    %p59 = scmp.eq.s32.totalorder 0, 0
    // Predicated region
    $region30: #{tpu_custom_call.1} parent=1 // pred_check
      %p60 = pneg %p59
    $region31: #{tpu_custom_call.1} parent=1 // pred_check_branch
      %62 = sbr.rel (%p60) target = $region33
    $region32: #{tpu_custom_call.1} parent=1 // pred_region
      %63 = vst [vmem:[#allocation2] sm:$0xff] 0.0
      %64 = vst [vmem:[#allocation2 + $0x8] sm:$0xff] 0.0
      %65 = vst [vmem:[#allocation2 + $0x10] sm:$0xff] 0.0
      %66 = vst [vmem:[#allocation2 + $0x18] sm:$0xff] 0.0
    $region33: #{tpu_custom_call.1} parent=1 // pred_fallthru
      _
    %v67 = vld [vmem:[#allocation3] sm:$0xff]
    %v68 = vld [vmem:[#allocation6] sm:$0xff]
    %v69 = vld [vmem:[#allocation6 + $0x8] sm:$0xff]
    %v70 = vld [vmem:[#allocation6 + $0x10] sm:$0xff]
    %v71 = vld [vmem:[#allocation6 + $0x18] sm:$0xff]
    %v72 = vld [vmem:[#allocation6 + $0x20] sm:$0xff]
    %v73 = vld [vmem:[#allocation6 + $0x28] sm:$0xff]
    %v74 = vld [vmem:[#allocation6 + $0x30] sm:$0xff]
    %v75 = vld [vmem:[#allocation6 + $0x38] sm:$0xff]
    %v77 = vunpack.i.l.s16 %v67
    %v78 = vunpack.i.h.s16 %v67
    %v79 = vpack.i.b16 %v77, %v77
    %v80 = vpack.i.b16 %v78, %v78
    %v81 = vlaneseq
    %v82 = vshrl.u32 %v81, 7
    %v83 = vsub.s32 0, %v82
    %v84 = vrot.slane %v79, %v83
    %v85 = vlaneseq
    %v86 = vshrl.u32 %v85, 7
    %v87 = vsub.s32 1, %v86
    %v88 = vrot.slane %v79, %v87
    %v89 = vlaneseq
    %v90 = vshrl.u32 %v89, 7
    %v91 = vsub.s32 2, %v90
    %v92 = vrot.slane %v79, %v91
    %v93 = vlaneseq
    %v94 = vshrl.u32 %v93, 7
    %v95 = vsub.s32 3, %v94
    %v96 = vrot.slane %v79, %v95
    %v97 = vlaneseq
    %v98 = vshrl.u32 %v97, 7
    %v99 = vsub.s32 4, %v98
    %v100 = vrot.slane %v79, %v99
    %v101 = vlaneseq
    %v102 = vshrl.u32 %v101, 7
    %v103 = vsub.s32 5, %v102
    %v104 = vrot.slane %v79, %v103
    %v105 = vlaneseq
    %v106 = vshrl.u32 %v105, 7
    %v107 = vsub.s32 6, %v106
    %v108 = vrot.slane %v79, %v107
    %v109 = vlaneseq
    %v110 = vshrl.u32 %v109, 7
    %v111 = vsub.s32 7, %v110
    %v112 = vrot.slane %v79, %v111
    %v113 = vlaneseq
    %v114 = vshrl.u32 %v113, 7
    %v115 = vsub.s32 0, %v114
    %v116 = vrot.slane %v80, %v115
    %v117 = vlaneseq
    %v118 = vshrl.u32 %v117, 7
    %v119 = vsub.s32 1, %v118
    %v120 = vrot.slane %v80, %v119
    %v121 = vlaneseq
    %v122 = vshrl.u32 %v121, 7
    %v123 = vsub.s32 2, %v122
    %v124 = vrot.slane %v80, %v123
    %v125 = vlaneseq
    %v126 = vshrl.u32 %v125, 7
    %v127 = vsub.s32 3, %v126
    %v128 = vrot.slane %v80, %v127
    %v129 = vlaneseq
    %v130 = vshrl.u32 %v129, 7
    %v131 = vsub.s32 4, %v130
    %v132 = vrot.slane %v80, %v131
    %v133 = vlaneseq
    %v134 = vshrl.u32 %v133, 7
    %v135 = vsub.s32 5, %v134
    %v136 = vrot.slane %v80, %v135
    %v137 = vlaneseq
    %v138 = vshrl.u32 %v137, 7
    %v139 = vsub.s32 6, %v138
    %v140 = vrot.slane %v80, %v139
    %v141 = vlaneseq
    %v142 = vshrl.u32 %v141, 7
    %v143 = vsub.s32 7, %v142
    %v144 = vrot.slane %v80, %v143
    %v146 = vpack.i.b16 %v84, %v84
    %v148 = vlaneseq
    %v149 = vshrl.u32 %v148, 7
    %v150 = vsub.s32 0, %v149
    %v151 = vrot.slane %v146, %v150
    %v153 = vpack.i.b16 %v88, %v88
    %v155 = vlaneseq
    %v156 = vshrl.u32 %v155, 7
    %v157 = vsub.s32 0, %v156
    %v158 = vrot.slane %v153, %v157
    %v160 = vpack.i.b16 %v92, %v92
    %v162 = vlaneseq
    %v163 = vshrl.u32 %v162, 7
    %v164 = vsub.s32 0, %v163
    %v165 = vrot.slane %v160, %v164
    %v167 = vpack.i.b16 %v96, %v96
    %v169 = vlaneseq
    %v170 = vshrl.u32 %v169, 7
    %v171 = vsub.s32 0, %v170
    %v172 = vrot.slane %v167, %v171
    %v174 = vpack.i.b16 %v100, %v100
    %v176 = vlaneseq
    %v177 = vshrl.u32 %v176, 7
    %v178 = vsub.s32 0, %v177
    %v179 = vrot.slane %v174, %v178
    %v181 = vpack.i.b16 %v104, %v104
    %v183 = vlaneseq
    %v184 = vshrl.u32 %v183, 7
    %v185 = vsub.s32 0, %v184
    %v186 = vrot.slane %v181, %v185
    %v188 = vpack.i.b16 %v108, %v108
    %v190 = vlaneseq
    %v191 = vshrl.u32 %v190, 7
    %v192 = vsub.s32 0, %v191
    %v193 = vrot.slane %v188, %v192
    %v195 = vpack.i.b16 %v112, %v112
    %v197 = vlaneseq
    %v198 = vshrl.u32 %v197, 7
    %v199 = vsub.s32 0, %v198
    %v200 = vrot.slane %v195, %v199
    %v202 = vpack.i.b16 %v116, %v116
    %v204 = vlaneseq
    %v205 = vshrl.u32 %v204, 7
    %v206 = vsub.s32 0, %v205
    %v207 = vrot.slane %v202, %v206
    %v209 = vpack.i.b16 %v120, %v120
    %v211 = vlaneseq
    %v212 = vshrl.u32 %v211, 7
    %v213 = vsub.s32 0, %v212
    %v214 = vrot.slane %v209, %v213
    %v216 = vpack.i.b16 %v124, %v124
    %v218 = vlaneseq
    %v219 = vshrl.u32 %v218, 7
    %v220 = vsub.s32 0, %v219
    %v221 = vrot.slane %v216, %v220
    %v223 = vpack.i.b16 %v128, %v128
    %v225 = vlaneseq
    %v226 = vshrl.u32 %v225, 7
    %v227 = vsub.s32 0, %v226
    %v228 = vrot.slane %v223, %v227
    %v230 = vpack.i.b16 %v132, %v132
    %v232 = vlaneseq
    %v233 = vshrl.u32 %v232, 7
    %v234 = vsub.s32 0, %v233
    %v235 = vrot.slane %v230, %v234
    %v237 = vpack.i.b16 %v136, %v136
    %v239 = vlaneseq
    %v240 = vshrl.u32 %v239, 7
    %v241 = vsub.s32 0, %v240
    %v242 = vrot.slane %v237, %v241
    %v244 = vpack.i.b16 %v140, %v140
    %v246 = vlaneseq
    %v247 = vshrl.u32 %v246, 7
    %v248 = vsub.s32 0, %v247
    %v249 = vrot.slane %v244, %v248
    %v251 = vpack.i.b16 %v144, %v144
    %v253 = vlaneseq
    %v254 = vshrl.u32 %v253, 7
    %v255 = vsub.s32 0, %v254
    %v256 = vrot.slane %v251, %v255
    %v265 = vunpack.c.l.b16 %v68
    %v266 = vunpack.c.h.b16 %v68
    %v267 = vunpack.c.l.b16 %v69
    %v268 = vunpack.c.h.b16 %v69
    %v269 = vunpack.c.l.b16 %v70
    %v270 = vunpack.c.h.b16 %v70
    %v271 = vunpack.c.l.b16 %v71
    %v272 = vunpack.c.h.b16 %v71
    %v273 = vunpack.c.l.b16 %v72
    %v274 = vunpack.c.h.b16 %v72
    %v275 = vunpack.c.l.b16 %v73
    %v276 = vunpack.c.h.b16 %v73
    %v277 = vunpack.c.l.b16 %v74
    %v278 = vunpack.c.h.b16 %v74
    %v279 = vunpack.c.l.b16 %v75
    %v280 = vunpack.c.h.b16 %v75
    %v281 = vpack.c.b16 %v273, %v265
    %v282 = vpack.c.b16 %v274, %v266
    %v283 = vpack.c.b16 %v275, %v267
    %v284 = vpack.c.b16 %v276, %v268
    %v285 = vpack.c.b16 %v277, %v269
    %v286 = vpack.c.b16 %v278, %v270
    %v287 = vpack.c.b16 %v279, %v271
    %v288 = vpack.c.b16 %v280, %v272
    %v297 = vadd.bf16 %v151, %v281
    %v298 = vadd.bf16 %v158, %v282
    %v299 = vadd.bf16 %v165, %v283
    %v300 = vadd.bf16 %v172, %v284
    %v301 = vadd.bf16 %v179, %v285
    %v302 = vadd.bf16 %v186, %v286
    %v303 = vadd.bf16 %v193, %v287
    %v304 = vadd.bf16 %v200, %v288
    %v305 = vadd.bf16 %v207, %v281
    %v306 = vadd.bf16 %v214, %v282
    %v307 = vadd.bf16 %v221, %v283
    %v308 = vadd.bf16 %v228, %v284
    %v309 = vadd.bf16 %v235, %v285
    %v310 = vadd.bf16 %v242, %v286
    %v311 = vadd.bf16 %v249, %v287
    %v312 = vadd.bf16 %v256, %v288
    %v313 = vmax.bf16 %v297, 0
    %v314 = vmax.bf16 %v298, 0
    %v315 = vmax.bf16 %v299, 0
    %v316 = vmax.bf16 %v300, 0
    %v317 = vmax.bf16 %v301, 0
    %v318 = vmax.bf16 %v302, 0
    %v319 = vmax.bf16 %v303, 0
    %v320 = vmax.bf16 %v304, 0
    %v321 = vmax.bf16 %v305, 0
    %v322 = vmax.bf16 %v306, 0
    %v323 = vmax.bf16 %v307, 0
    %v324 = vmax.bf16 %v308, 0
    %v325 = vmax.bf16 %v309, 0
    %v326 = vmax.bf16 %v310, 0
    %v327 = vmax.bf16 %v311, 0
    %v328 = vmax.bf16 %v312, 0
    %v329 = vmin.bf16 %v313, 1065369472
    %v330 = vmin.bf16 %v314, 1065369472
    %v331 = vmin.bf16 %v315, 1065369472
    %v332 = vmin.bf16 %v316, 1065369472
    %v333 = vmin.bf16 %v317, 1065369472
    %v334 = vmin.bf16 %v318, 1065369472
    %v335 = vmin.bf16 %v319, 1065369472
    %v336 = vmin.bf16 %v320, 1065369472
    %v337 = vmin.bf16 %v321, 1065369472
    %v338 = vmin.bf16 %v322, 1065369472
    %v339 = vmin.bf16 %v323, 1065369472
    %v340 = vmin.bf16 %v324, 1065369472
    %v341 = vmin.bf16 %v325, 1065369472
    %v342 = vmin.bf16 %v326, 1065369472
    %v343 = vmin.bf16 %v327, 1065369472
    %v344 = vmin.bf16 %v328, 1065369472
    %v345 = vld [vmem:[#allocation2] sm:$0xff]
    %v346 = vld [vmem:[#allocation2 + $0x8] sm:$0xff]
    %v347 = vld [vmem:[#allocation2 + $0x10] sm:$0xff]
    %v348 = vld [vmem:[#allocation2 + $0x18] sm:$0xff]
    %v349 = vld [vmem:[#allocation8] sm:$0xf]
    %v350 = vld [vmem:[#allocation8 + $0x4] sm:$0xf]
    %v351 = vld [vmem:[#allocation8 + $0x8] sm:$0xf]
    %v352 = vld [vmem:[#allocation8 + $0xc] sm:$0xf]
    %v353 = vld [vmem:[#allocation8 + $0x10] sm:$0xf]
    %v354 = vld [vmem:[#allocation8 + $0x14] sm:$0xf]
    %v355 = vld [vmem:[#allocation8 + $0x18] sm:$0xf]
    %v356 = vld [vmem:[#allocation8 + $0x1c] sm:$0xf]
    %v357 = vld [vmem:[#allocation8 + $0x20] sm:$0xf]
    %v358 = vld [vmem:[#allocation8 + $0x24] sm:$0xf]
    %v359 = vld [vmem:[#allocation8 + $0x28] sm:$0xf]
    %v360 = vld [vmem:[#allocation8 + $0x2c] sm:$0xf]
    %v361 = vld [vmem:[#allocation8 + $0x30] sm:$0xf]
    %v362 = vld [vmem:[#allocation8 + $0x34] sm:$0xf]
    %v363 = vld [vmem:[#allocation8 + $0x38] sm:$0xf]
    %v364 = vld [vmem:[#allocation8 + $0x3c] sm:$0xf]
    %v365 = vld [vmem:[#allocation8 + $0x40] sm:$0xf]
    %v366 = vld [vmem:[#allocation8 + $0x44] sm:$0xf]
    %v367 = vld [vmem:[#allocation8 + $0x48] sm:$0xf]
    %v368 = vld [vmem:[#allocation8 + $0x4c] sm:$0xf]
    %v369 = vld [vmem:[#allocation8 + $0x50] sm:$0xf]
    %v370 = vld [vmem:[#allocation8 + $0x54] sm:$0xf]
    %v371 = vld [vmem:[#allocation8 + $0x58] sm:$0xf]
    %v372 = vld [vmem:[#allocation8 + $0x5c] sm:$0xf]
    %v373 = vld [vmem:[#allocation8 + $0x60] sm:$0xf]
    %v374 = vld [vmem:[#allocation8 + $0x64] sm:$0xf]
    %v375 = vld [vmem:[#allocation8 + $0x68] sm:$0xf]
    %v376 = vld [vmem:[#allocation8 + $0x6c] sm:$0xf]
    %v377 = vld [vmem:[#allocation8 + $0x70] sm:$0xf]
    %v378 = vld [vmem:[#allocation8 + $0x74] sm:$0xf]
    %v379 = vld [vmem:[#allocation8 + $0x78] sm:$0xf]
    %v380 = vld [vmem:[#allocation8 + $0x7c] sm:$0xf]
    %v381 = vld [vmem:[#allocation8 + $0x80] sm:$0xf]
    %v382 = vld [vmem:[#allocation8 + $0x84] sm:$0xf]
    %v383 = vld [vmem:[#allocation8 + $0x88] sm:$0xf]
    %v384 = vld [vmem:[#allocation8 + $0x8c] sm:$0xf]
    %v385 = vld [vmem:[#allocation8 + $0x90] sm:$0xf]
    %v386 = vld [vmem:[#allocation8 + $0x94] sm:$0xf]
    %v387 = vld [vmem:[#allocation8 + $0x98] sm:$0xf]
    %v388 = vld [vmem:[#allocation8 + $0x9c] sm:$0xf]
    %v389 = vld [vmem:[#allocation8 + $0xa0] sm:$0xf]
    %v390 = vld [vmem:[#allocation8 + $0xa4] sm:$0xf]
    %v391 = vld [vmem:[#allocation8 + $0xa8] sm:$0xf]
    %v392 = vld [vmem:[#allocation8 + $0xac] sm:$0xf]
    %v393 = vld [vmem:[#allocation8 + $0xb0] sm:$0xf]
    %v394 = vld [vmem:[#allocation8 + $0xb4] sm:$0xf]
    %v395 = vld [vmem:[#allocation8 + $0xb8] sm:$0xf]
    %v396 = vld [vmem:[#allocation8 + $0xbc] sm:$0xf]
    %v397 = vld [vmem:[#allocation8 + $0xc0] sm:$0xf]
    %v398 = vld [vmem:[#allocation8 + $0xc4] sm:$0xf]
    %v399 = vld [vmem:[#allocation8 + $0xc8] sm:$0xf]
    %v400 = vld [vmem:[#allocation8 + $0xcc] sm:$0xf]
    %v401 = vld [vmem:[#allocation8 + $0xd0] sm:$0xf]
    %v402 = vld [vmem:[#allocation8 + $0xd4] sm:$0xf]
    %v403 = vld [vmem:[#allocation8 + $0xd8] sm:$0xf]
    %v404 = vld [vmem:[#allocation8 + $0xdc] sm:$0xf]
    %v405 = vld [vmem:[#allocation8 + $0xe0] sm:$0xf]
    %v406 = vld [vmem:[#allocation8 + $0xe4] sm:$0xf]
    %v407 = vld [vmem:[#allocation8 + $0xe8] sm:$0xf]
    %v408 = vld [vmem:[#allocation8 + $0xec] sm:$0xf]
    %v409 = vld [vmem:[#allocation8 + $0xf0] sm:$0xf]
    %v410 = vld [vmem:[#allocation8 + $0xf4] sm:$0xf]
    %v411 = vld [vmem:[#allocation8 + $0xf8] sm:$0xf]
    %v412 = vld [vmem:[#allocation8 + $0xfc] sm:$0xf]
    %v413 = vld [vmem:[#allocation8 + $0x100] sm:$0xf]
    %v414 = vld [vmem:[#allocation8 + $0x104] sm:$0xf]
    %v415 = vld [vmem:[#allocation8 + $0x108] sm:$0xf]
    %v416 = vld [vmem:[#allocation8 + $0x10c] sm:$0xf]
    %v417 = vld [vmem:[#allocation8 + $0x110] sm:$0xf]
    %v418 = vld [vmem:[#allocation8 + $0x114] sm:$0xf]
    %v419 = vld [vmem:[#allocation8 + $0x118] sm:$0xf]
    %v420 = vld [vmem:[#allocation8 + $0x11c] sm:$0xf]
    %v421 = vld [vmem:[#allocation8 + $0x120] sm:$0xf]
    %v422 = vld [vmem:[#allocation8 + $0x124] sm:$0xf]
    %v423 = vld [vmem:[#allocation8 + $0x128] sm:$0xf]
    %v424 = vld [vmem:[#allocation8 + $0x12c] sm:$0xf]
    %v425 = vld [vmem:[#allocation8 + $0x130] sm:$0xf]
    %v426 = vld [vmem:[#allocation8 + $0x134] sm:$0xf]
    %v427 = vld [vmem:[#allocation8 + $0x138] sm:$0xf]
    %v428 = vld [vmem:[#allocation8 + $0x13c] sm:$0xf]
    %v429 = vld [vmem:[#allocation8 + $0x140] sm:$0xf]
    %v430 = vld [vmem:[#allocation8 + $0x144] sm:$0xf]
    %v431 = vld [vmem:[#allocation8 + $0x148] sm:$0xf]
    %v432 = vld [vmem:[#allocation8 + $0x14c] sm:$0xf]
    %v433 = vld [vmem:[#allocation8 + $0x150] sm:$0xf]
    %v434 = vld [vmem:[#allocation8 + $0x154] sm:$0xf]
    %v435 = vld [vmem:[#allocation8 + $0x158] sm:$0xf]
    %v436 = vld [vmem:[#allocation8 + $0x15c] sm:$0xf]
    %v437 = vld [vmem:[#allocation8 + $0x160] sm:$0xf]
    %v438 = vld [vmem:[#allocation8 + $0x164] sm:$0xf]
    %v439 = vld [vmem:[#allocation8 + $0x168] sm:$0xf]
    %v440 = vld [vmem:[#allocation8 + $0x16c] sm:$0xf]
    %v441 = vld [vmem:[#allocation8 + $0x170] sm:$0xf]
    %v442 = vld [vmem:[#allocation8 + $0x174] sm:$0xf]
    %v443 = vld [vmem:[#allocation8 + $0x178] sm:$0xf]
    %v444 = vld [vmem:[#allocation8 + $0x17c] sm:$0xf]
    %v445 = vld [vmem:[#allocation8 + $0x180] sm:$0xf]
    %v446 = vld [vmem:[#allocation8 + $0x184] sm:$0xf]
    %v447 = vld [vmem:[#allocation8 + $0x188] sm:$0xf]
    %v448 = vld [vmem:[#allocation8 + $0x18c] sm:$0xf]
    %v449 = vld [vmem:[#allocation8 + $0x190] sm:$0xf]
    %v450 = vld [vmem:[#allocation8 + $0x194] sm:$0xf]
    %v451 = vld [vmem:[#allocation8 + $0x198] sm:$0xf]
    %v452 = vld [vmem:[#allocation8 + $0x19c] sm:$0xf]
    %v453 = vld [vmem:[#allocation8 + $0x1a0] sm:$0xf]
    %v454 = vld [vmem:[#allocation8 + $0x1a4] sm:$0xf]
    %v455 = vld [vmem:[#allocation8 + $0x1a8] sm:$0xf]
    %v456 = vld [vmem:[#allocation8 + $0x1ac] sm:$0xf]
    %v457 = vld [vmem:[#allocation8 + $0x1b0] sm:$0xf]
    %v458 = vld [vmem:[#allocation8 + $0x1b4] sm:$0xf]
    %v459 = vld [vmem:[#allocation8 + $0x1b8] sm:$0xf]
    %v460 = vld [vmem:[#allocation8 + $0x1bc] sm:$0xf]
    %v461 = vld [vmem:[#allocation8 + $0x1c0] sm:$0xf]
    %v462 = vld [vmem:[#allocation8 + $0x1c4] sm:$0xf]
    %v463 = vld [vmem:[#allocation8 + $0x1c8] sm:$0xf]
    %v464 = vld [vmem:[#allocation8 + $0x1cc] sm:$0xf]
    %v465 = vld [vmem:[#allocation8 + $0x1d0] sm:$0xf]
    %v466 = vld [vmem:[#allocation8 + $0x1d4] sm:$0xf]
    %v467 = vld [vmem:[#allocation8 + $0x1d8] sm:$0xf]
    %v468 = vld [vmem:[#allocation8 + $0x1dc] sm:$0xf]
    %v469 = vld [vmem:[#allocation8 + $0x1e0] sm:$0xf]
    %v470 = vld [vmem:[#allocation8 + $0x1e4] sm:$0xf]
    %v471 = vld [vmem:[#allocation8 + $0x1e8] sm:$0xf]
    %v472 = vld [vmem:[#allocation8 + $0x1ec] sm:$0xf]
    %v473 = vld [vmem:[#allocation8 + $0x1f0] sm:$0xf]
    %v474 = vld [vmem:[#allocation8 + $0x1f4] sm:$0xf]
    %v475 = vld [vmem:[#allocation8 + $0x1f8] sm:$0xf]
    %v476 = vld [vmem:[#allocation8 + $0x1fc] sm:$0xf]
    %v605 = vunpack.c.l.b16 %v349
    %v606 = vunpack.c.l.b16 %v350
    %v607 = vunpack.c.l.b16 %v351
    %v608 = vunpack.c.l.b16 %v352
    %v609 = vunpack.c.l.b16 %v353
    %v610 = vunpack.c.l.b16 %v354
    %v611 = vunpack.c.l.b16 %v355
    %v612 = vunpack.c.l.b16 %v356
    %v613 = vunpack.c.l.b16 %v357
    %v614 = vunpack.c.l.b16 %v358
    %v615 = vunpack.c.l.b16 %v359
    %v616 = vunpack.c.l.b16 %v360
    %v617 = vunpack.c.l.b16 %v361
    %v618 = vunpack.c.l.b16 %v362
    %v619 = vunpack.c.l.b16 %v363
    %v620 = vunpack.c.l.b16 %v364
    %v621 = vunpack.c.l.b16 %v365
    %v622 = vunpack.c.l.b16 %v366
    %v623 = vunpack.c.l.b16 %v367
    %v624 = vunpack.c.l.b16 %v368
    %v625 = vunpack.c.l.b16 %v369
    %v626 = vunpack.c.l.b16 %v370
    %v627 = vunpack.c.l.b16 %v371
    %v628 = vunpack.c.l.b16 %v372
    %v629 = vunpack.c.l.b16 %v373
    %v630 = vunpack.c.l.b16 %v374
    %v631 = vunpack.c.l.b16 %v375
    %v632 = vunpack.c.l.b16 %v376
    %v633 = vunpack.c.l.b16 %v377
    %v634 = vunpack.c.l.b16 %v378
    %v635 = vunpack.c.l.b16 %v379
    %v636 = vunpack.c.l.b16 %v380
    %v637 = vunpack.c.l.b16 %v381
    %v638 = vunpack.c.l.b16 %v382
    %v639 = vunpack.c.l.b16 %v383
    %v640 = vunpack.c.l.b16 %v384
    %v641 = vunpack.c.l.b16 %v385
    %v642 = vunpack.c.l.b16 %v386
    %v643 = vunpack.c.l.b16 %v387
    %v644 = vunpack.c.l.b16 %v388
    %v645 = vunpack.c.l.b16 %v389
    %v646 = vunpack.c.l.b16 %v390
    %v647 = vunpack.c.l.b16 %v391
    %v648 = vunpack.c.l.b16 %v392
    %v649 = vunpack.c.l.b16 %v393
    %v650 = vunpack.c.l.b16 %v394
    %v651 = vunpack.c.l.b16 %v395
    %v652 = vunpack.c.l.b16 %v396
    %v653 = vunpack.c.l.b16 %v397
    %v654 = vunpack.c.l.b16 %v398
    %v655 = vunpack.c.l.b16 %v399
    %v656 = vunpack.c.l.b16 %v400
    %v657 = vunpack.c.l.b16 %v401
    %v658 = vunpack.c.l.b16 %v402
    %v659 = vunpack.c.l.b16 %v403
    %v660 = vunpack.c.l.b16 %v404
    %v661 = vunpack.c.l.b16 %v405
    %v662 = vunpack.c.l.b16 %v406
    %v663 = vunpack.c.l.b16 %v407
    %v664 = vunpack.c.l.b16 %v408
    %v665 = vunpack.c.l.b16 %v409
    %v666 = vunpack.c.l.b16 %v410
    %v667 = vunpack.c.l.b16 %v411
    %v668 = vunpack.c.l.b16 %v412
    %v669 = vunpack.c.l.b16 %v413
    %v670 = vunpack.c.l.b16 %v414
    %v671 = vunpack.c.l.b16 %v415
    %v672 = vunpack.c.l.b16 %v416
    %v673 = vunpack.c.l.b16 %v417
    %v674 = vunpack.c.l.b16 %v418
    %v675 = vunpack.c.l.b16 %v419
    %v676 = vunpack.c.l.b16 %v420
    %v677 = vunpack.c.l.b16 %v421
    %v678 = vunpack.c.l.b16 %v422
    %v679 = vunpack.c.l.b16 %v423
    %v680 = vunpack.c.l.b16 %v424
    %v681 = vunpack.c.l.b16 %v425
    %v682 = vunpack.c.l.b16 %v426
    %v683 = vunpack.c.l.b16 %v427
    %v684 = vunpack.c.l.b16 %v428
    %v685 = vunpack.c.l.b16 %v429
    %v686 = vunpack.c.l.b16 %v430
    %v687 = vunpack.c.l.b16 %v431
    %v688 = vunpack.c.l.b16 %v432
    %v689 = vunpack.c.l.b16 %v433
    %v690 = vunpack.c.l.b16 %v434
    %v691 = vunpack.c.l.b16 %v435
    %v692 = vunpack.c.l.b16 %v436
    %v693 = vunpack.c.l.b16 %v437
    %v694 = vunpack.c.l.b16 %v438
    %v695 = vunpack.c.l.b16 %v439
    %v696 = vunpack.c.l.b16 %v440
    %v697 = vunpack.c.l.b16 %v441
    %v698 = vunpack.c.l.b16 %v442
    %v699 = vunpack.c.l.b16 %v443
    %v700 = vunpack.c.l.b16 %v444
    %v701 = vunpack.c.l.b16 %v445
    %v702 = vunpack.c.l.b16 %v446
    %v703 = vunpack.c.l.b16 %v447
    %v704 = vunpack.c.l.b16 %v448
    %v705 = vunpack.c.l.b16 %v449
    %v706 = vunpack.c.l.b16 %v450
    %v707 = vunpack.c.l.b16 %v451
    %v708 = vunpack.c.l.b16 %v452
    %v709 = vunpack.c.l.b16 %v453
    %v710 = vunpack.c.l.b16 %v454
    %v711 = vunpack.c.l.b16 %v455
    %v712 = vunpack.c.l.b16 %v456
    %v713 = vunpack.c.l.b16 %v457
    %v714 = vunpack.c.l.b16 %v458
    %v715 = vunpack.c.l.b16 %v459
    %v716 = vunpack.c.l.b16 %v460
    %v717 = vunpack.c.l.b16 %v461
    %v718 = vunpack.c.l.b16 %v462
    %v719 = vunpack.c.l.b16 %v463
    %v720 = vunpack.c.l.b16 %v464
    %v721 = vunpack.c.l.b16 %v465
    %v722 = vunpack.c.l.b16 %v466
    %v723 = vunpack.c.l.b16 %v467
    %v724 = vunpack.c.l.b16 %v468
    %v725 = vunpack.c.l.b16 %v469
    %v726 = vunpack.c.l.b16 %v470
    %v727 = vunpack.c.l.b16 %v471
    %v728 = vunpack.c.l.b16 %v472
    %v729 = vunpack.c.l.b16 %v473
    %v730 = vunpack.c.l.b16 %v474
    %v731 = vunpack.c.l.b16 %v475
    %v732 = vunpack.c.l.b16 %v476
    %v733 = vpack.c.b16 %v606, %v605
    %v734 = vpack.c.b16 %v608, %v607
    %v735 = vpack.c.b16 %v610, %v609
    %v736 = vpack.c.b16 %v612, %v611
    %v737 = vpack.c.b16 %v614, %v613
    %v738 = vpack.c.b16 %v616, %v615
    %v739 = vpack.c.b16 %v618, %v617
    %v740 = vpack.c.b16 %v620, %v619
    %v741 = vpack.c.b16 %v622, %v621
    %v742 = vpack.c.b16 %v624, %v623
    %v743 = vpack.c.b16 %v626, %v625
    %v744 = vpack.c.b16 %v628, %v627
    %v745 = vpack.c.b16 %v630, %v629
    %v746 = vpack.c.b16 %v632, %v631
    %v747 = vpack.c.b16 %v634, %v633
    %v748 = vpack.c.b16 %v636, %v635
    %v749 = vpack.c.b16 %v638, %v637
    %v750 = vpack.c.b16 %v640, %v639
    %v751 = vpack.c.b16 %v642, %v641
    %v752 = vpack.c.b16 %v644, %v643
    %v753 = vpack.c.b16 %v646, %v645
    %v754 = vpack.c.b16 %v648, %v647
    %v755 = vpack.c.b16 %v650, %v649
    %v756 = vpack.c.b16 %v652, %v651
    %v757 = vpack.c.b16 %v654, %v653
    %v758 = vpack.c.b16 %v656, %v655
    %v759 = vpack.c.b16 %v658, %v657
    %v760 = vpack.c.b16 %v660, %v659
    %v761 = vpack.c.b16 %v662, %v661
    %v762 = vpack.c.b16 %v664, %v663
    %v763 = vpack.c.b16 %v666, %v665
    %v764 = vpack.c.b16 %v668, %v667
    %v765 = vpack.c.b16 %v670, %v669
    %v766 = vpack.c.b16 %v672, %v671
    %v767 = vpack.c.b16 %v674, %v673
    %v768 = vpack.c.b16 %v676, %v675
    %v769 = vpack.c.b16 %v678, %v677
    %v770 = vpack.c.b16 %v680, %v679
    %v771 = vpack.c.b16 %v682, %v681
    %v772 = vpack.c.b16 %v684, %v683
    %v773 = vpack.c.b16 %v686, %v685
    %v774 = vpack.c.b16 %v688, %v687
    %v775 = vpack.c.b16 %v690, %v689
    %v776 = vpack.c.b16 %v692, %v691
    %v777 = vpack.c.b16 %v694, %v693
    %v778 = vpack.c.b16 %v696, %v695
    %v779 = vpack.c.b16 %v698, %v697
    %v780 = vpack.c.b16 %v700, %v699
    %v781 = vpack.c.b16 %v702, %v701
    %v782 = vpack.c.b16 %v704, %v703
    %v783 = vpack.c.b16 %v706, %v705
    %v784 = vpack.c.b16 %v708, %v707
    %v785 = vpack.c.b16 %v710, %v709
    %v786 = vpack.c.b16 %v712, %v711
    %v787 = vpack.c.b16 %v714, %v713
    %v788 = vpack.c.b16 %v716, %v715
    %v789 = vpack.c.b16 %v718, %v717
    %v790 = vpack.c.b16 %v720, %v719
    %v791 = vpack.c.b16 %v722, %v721
    %v792 = vpack.c.b16 %v724, %v723
    %v793 = vpack.c.b16 %v726, %v725
    %v794 = vpack.c.b16 %v728, %v727
    %v795 = vpack.c.b16 %v730, %v729
    %v796 = vpack.c.b16 %v732, %v731
    %861 = vmatprep.subr.bf16.mxu0 0
    %862 = vmatpush1.bf16.msra.mxu0 %v740
    %863 = vmatprep.subr.bf16.mxu0 0
    %864 = vmatpush1.bf16.msra.mxu0 %v739
    %865 = vmatprep.subr.bf16.mxu0 0
    %866 = vmatpush1.bf16.msra.mxu0 %v738
    %867 = vmatprep.subr.bf16.mxu0 0
    %868 = vmatpush1.bf16.msra.mxu0 %v737
    %869 = vmatprep.subr.bf16.mxu0 0
    %870 = vmatpush1.bf16.msra.mxu0 %v736
    %871 = vmatprep.subr.bf16.mxu0 0
    %872 = vmatpush1.bf16.msra.mxu0 %v735
    %873 = vmatprep.subr.bf16.mxu0 0
    %874 = vmatpush1.bf16.msra.mxu0 %v734
    %875 = vmatprep.subr.bf16.mxu0 0
    %876 = vmatpush1.bf16.msra.mxu0 %v733
    %877 = vmatprep.subr.bf16.mxu0 0
    %878 = vmatpush2.bf16.msra.mxu0 %v748
    %879 = vmatprep.subr.bf16.mxu0 0
    %880 = vmatpush2.bf16.msra.mxu0 %v747
    %881 = vmatprep.subr.bf16.mxu0 0
    %882 = vmatpush2.bf16.msra.mxu0 %v746
    %883 = vmatprep.subr.bf16.mxu0 0
    %884 = vmatpush2.bf16.msra.mxu0 %v745
    %885 = vmatprep.subr.bf16.mxu0 0
    %886 = vmatpush2.bf16.msra.mxu0 %v744
    %887 = vmatprep.subr.bf16.mxu0 0
    %888 = vmatpush2.bf16.msra.mxu0 %v743
    %889 = vmatprep.subr.bf16.mxu0 0
    %890 = vmatpush2.bf16.msra.mxu0 %v742
    %891 = vmatprep.subr.bf16.mxu0 0
    %892 = vmatpush2.bf16.msra.mxu0 %v741
    %893 = vmatprep.mubr.bf16.mxu0 %v330
    %894 = vmatmul.mubr.bf16.gmra.mxu0 %v329
    %v895 = vpop.f32.mrf.mxu0
    %v896 = vadd.f32 0.0, %v895
    %v897 = vpop.f32.mrf.mxu0
    %v898 = vpop.f32.mrf.mxu0
    %v899 = vadd.f32 0.0, %v898
    %v900 = vpop.f32.mrf.mxu0
    %901 = vmatprep.mubr.bf16.mxu0 %v338
    %902 = vmatmul.mubr.bf16.gmra.mxu0 %v337
    %v903 = vpop.f32.mrf.mxu0
    %v904 = vadd.f32 0.0, %v903
    %v905 = vpop.f32.mrf.mxu0
    %v906 = vpop.f32.mrf.mxu0
    %v907 = vadd.f32 0.0, %v906
    %v908 = vpop.f32.mrf.mxu0
    %909 = vdwg.mxu0
    %910 = vmatprep.subr.bf16.mxu0 0
    %911 = vmatpush1.bf16.msra.mxu0 %v756
    %912 = vmatprep.subr.bf16.mxu0 0
    %913 = vmatpush1.bf16.msra.mxu0 %v755
    %914 = vmatprep.subr.bf16.mxu0 0
    %915 = vmatpush1.bf16.msra.mxu0 %v754
    %916 = vmatprep.subr.bf16.mxu0 0
    %917 = vmatpush1.bf16.msra.mxu0 %v753
    %918 = vmatprep.subr.bf16.mxu0 0
    %919 = vmatpush1.bf16.msra.mxu0 %v752
    %920 = vmatprep.subr.bf16.mxu0 0
    %921 = vmatpush1.bf16.msra.mxu0 %v751
    %922 = vmatprep.subr.bf16.mxu0 0
    %923 = vmatpush1.bf16.msra.mxu0 %v750
    %924 = vmatprep.subr.bf16.mxu0 0
    %925 = vmatpush1.bf16.msra.mxu0 %v749
    %926 = vmatprep.subr.bf16.mxu0 0
    %927 = vmatpush2.bf16.msra.mxu0 %v764
    %928 = vmatprep.subr.bf16.mxu0 0
    %929 = vmatpush2.bf16.msra.mxu0 %v763
    %930 = vmatprep.subr.bf16.mxu0 0
    %931 = vmatpush2.bf16.msra.mxu0 %v762
    %932 = vmatprep.subr.bf16.mxu0 0
    %933 = vmatpush2.bf16.msra.mxu0 %v761
    %934 = vmatprep.subr.bf16.mxu0 0
    %935 = vmatpush2.bf16.msra.mxu0 %v760
    %936 = vmatprep.subr.bf16.mxu0 0
    %937 = vmatpush2.bf16.msra.mxu0 %v759
    %938 = vmatprep.subr.bf16.mxu0 0
    %939 = vmatpush2.bf16.msra.mxu0 %v758
    %940 = vmatprep.subr.bf16.mxu0 0
    %941 = vmatpush2.bf16.msra.mxu0 %v757
    %942 = vmatprep.mubr.bf16.mxu0 %v332
    %943 = vmatmul.mubr.bf16.gmra.mxu0 %v331
    %v944 = vpop.f32.mrf.mxu0
    %v945 = vadd.f32 %v896, %v944
    %v946 = vpop.f32.mrf.mxu0
    %v947 = vpop.f32.mrf.mxu0
    %v948 = vadd.f32 %v899, %v947
    %v949 = vpop.f32.mrf.mxu0
    %950 = vmatprep.mubr.bf16.mxu0 %v340
    %951 = vmatmul.mubr.bf16.gmra.mxu0 %v339
    %v952 = vpop.f32.mrf.mxu0
    %v953 = vadd.f32 %v904, %v952
    %v954 = vpop.f32.mrf.mxu0
    %v955 = vpop.f32.mrf.mxu0
    %v956 = vadd.f32 %v907, %v955
    %v957 = vpop.f32.mrf.mxu0
    %958 = vdwg.mxu0
    %959 = vmatprep.subr.bf16.mxu0 0
    %960 = vmatpush1.bf16.msra.mxu0 %v772
    %961 = vmatprep.subr.bf16.mxu0 0
    %962 = vmatpush1.bf16.msra.mxu0 %v771
    %963 = vmatprep.subr.bf16.mxu0 0
    %964 = vmatpush1.bf16.msra.mxu0 %v770
    %965 = vmatprep.subr.bf16.mxu0 0
    %966 = vmatpush1.bf16.msra.mxu0 %v769
    %967 = vmatprep.subr.bf16.mxu0 0
    %968 = vmatpush1.bf16.msra.mxu0 %v768
    %969 = vmatprep.subr.bf16.mxu0 0
    %970 = vmatpush1.bf16.msra.mxu0 %v767
    %971 = vmatprep.subr.bf16.mxu0 0
    %972 = vmatpush1.bf16.msra.mxu0 %v766
    %973 = vmatprep.subr.bf16.mxu0 0
    %974 = vmatpush1.bf16.msra.mxu0 %v765
    %975 = vmatprep.subr.bf16.mxu0 0
    %976 = vmatpush2.bf16.msra.mxu0 %v780
    %977 = vmatprep.subr.bf16.mxu0 0
    %978 = vmatpush2.bf16.msra.mxu0 %v779
    %979 = vmatprep.subr.bf16.mxu0 0
    %980 = vmatpush2.bf16.msra.mxu0 %v778
    %981 = vmatprep.subr.bf16.mxu0 0
    %982 = vmatpush2.bf16.msra.mxu0 %v777
    %983 = vmatprep.subr.bf16.mxu0 0
    %984 = vmatpush2.bf16.msra.mxu0 %v776
    %985 = vmatprep.subr.bf16.mxu0 0
    %986 = vmatpush2.bf16.msra.mxu0 %v775
    %987 = vmatprep.subr.bf16.mxu0 0
    %988 = vmatpush2.bf16.msra.mxu0 %v774
    %989 = vmatprep.subr.bf16.mxu0 0
    %990 = vmatpush2.bf16.msra.mxu0 %v773
    %991 = vmatprep.mubr.bf16.mxu0 %v334
    %992 = vmatmul.mubr.bf16.gmra.mxu0 %v333
    %v993 = vpop.f32.mrf.mxu0
    %v994 = vadd.f32 %v945, %v993
    %v995 = vpop.f32.mrf.mxu0
    %v996 = vpop.f32.mrf.mxu0
    %v997 = vadd.f32 %v948, %v996
    %v998 = vpop.f32.mrf.mxu0
    %999 = vmatprep.mubr.bf16.mxu0 %v342
    %1000 = vmatmul.mubr.bf16.gmra.mxu0 %v341
    %v1001 = vpop.f32.mrf.mxu0
    %v1002 = vadd.f32 %v953, %v1001
    %v1003 = vpop.f32.mrf.mxu0
    %v1004 = vpop.f32.mrf.mxu0
    %v1005 = vadd.f32 %v956, %v1004
    %v1006 = vpop.f32.mrf.mxu0
    %1007 = vdwg.mxu0
    %1008 = vmatprep.subr.bf16.mxu0 0
    %1009 = vmatpush1.bf16.msra.mxu0 %v788
    %1010 = vmatprep.subr.bf16.mxu0 0
    %1011 = vmatpush1.bf16.msra.mxu0 %v787
    %1012 = vmatprep.subr.bf16.mxu0 0
    %1013 = vmatpush1.bf16.msra.mxu0 %v786
    %1014 = vmatprep.subr.bf16.mxu0 0
    %1015 = vmatpush1.bf16.msra.mxu0 %v785
    %1016 = vmatprep.subr.bf16.mxu0 0
    %1017 = vmatpush1.bf16.msra.mxu0 %v784
    %1018 = vmatprep.subr.bf16.mxu0 0
    %1019 = vmatpush1.bf16.msra.mxu0 %v783
    %1020 = vmatprep.subr.bf16.mxu0 0
    %1021 = vmatpush1.bf16.msra.mxu0 %v782
    %1022 = vmatprep.subr.bf16.mxu0 0
    %1023 = vmatpush1.bf16.msra.mxu0 %v781
    %1024 = vmatprep.subr.bf16.mxu0 0
    %1025 = vmatpush2.bf16.msra.mxu0 %v796
    %1026 = vmatprep.subr.bf16.mxu0 0
    %1027 = vmatpush2.bf16.msra.mxu0 %v795
    %1028 = vmatprep.subr.bf16.mxu0 0
    %1029 = vmatpush2.bf16.msra.mxu0 %v794
    %1030 = vmatprep.subr.bf16.mxu0 0
    %1031 = vmatpush2.bf16.msra.mxu0 %v793
    %1032 = vmatprep.subr.bf16.mxu0 0
    %1033 = vmatpush2.bf16.msra.mxu0 %v792
    %1034 = vmatprep.subr.bf16.mxu0 0
    %1035 = vmatpush2.bf16.msra.mxu0 %v791
    %1036 = vmatprep.subr.bf16.mxu0 0
    %1037 = vmatpush2.bf16.msra.mxu0 %v790
    %1038 = vmatprep.subr.bf16.mxu0 0
    %1039 = vmatpush2.bf16.msra.mxu0 %v789
    %1040 = vmatprep.mubr.bf16.mxu0 %v336
    %1041 = vmatmul.mubr.bf16.gmra.mxu0 %v335
    %v1042 = vpop.f32.mrf.mxu0
    %v1043 = vadd.f32 %v994, %v1042
    %v1044 = vpop.f32.mrf.mxu0
    %v1045 = vpop.f32.mrf.mxu0
    %v1046 = vadd.f32 %v997, %v1045
    %v1047 = vpop.f32.mrf.mxu0
    %1048 = vmatprep.mubr.bf16.mxu0 %v344
    %1049 = vmatmul.mubr.bf16.gmra.mxu0 %v343
    %v1050 = vpop.f32.mrf.mxu0
    %v1051 = vadd.f32 %v1002, %v1050
    %v1052 = vpop.f32.mrf.mxu0
    %v1053 = vpop.f32.mrf.mxu0
    %v1054 = vadd.f32 %v1005, %v1053
    %v1055 = vpop.f32.mrf.mxu0
    %1056 = vdwg.mxu0
    %v1057 = vadd.f32 %v345, %v1043
    %v1058 = vadd.f32 %v346, %v1046
    %v1059 = vadd.f32 %v347, %v1051
    %v1060 = vadd.f32 %v348, %v1054
    %1061 = vst [vmem:[#allocation2] sm:$0xff] %v1057
    %1062 = vst [vmem:[#allocation2 + $0x8] sm:$0xff] %v1058
    %1063 = vst [vmem:[#allocation2 + $0x10] sm:$0xff] %v1059
    %1064 = vst [vmem:[#allocation2 + $0x18] sm:$0xff] %v1060
    // Predicated region
    $region34: #{tpu_custom_call.1} parent=1 // pred_check
      %p1065 = pneg %p59
    $region35: #{tpu_custom_call.1} parent=1 // pred_check_branch
      %1067 = sbr.rel (%p1065) target = $region37
    $region36: #{tpu_custom_call.1} parent=1 // pred_region
      %v1068 = vld [vmem:[#allocation2] sm:$0xff]
      %v1069 = vld [vmem:[#allocation2 + $0x8] sm:$0xff]
      %v1070 = vld [vmem:[#allocation2 + $0x10] sm:$0xff]
      %v1071 = vld [vmem:[#allocation2 + $0x18] sm:$0xff]
      %v1072 = vld [vmem:[%s3] sm:$0x1]
      %v1074 = vlaneseq
      %v1075 = vshrl.u32 %v1074, 7
      %v1076 = vsub.s32 0, %v1075
      %v1077 = vrot.slane %v1072, %v1076
      %v1079 = vadd.f32 %v1068, %v1077
      %v1080 = vadd.f32 %v1069, %v1077
      %v1081 = vadd.f32 %v1070, %v1077
      %v1082 = vadd.f32 %v1071, %v1077
      %1083 = vmax.xlane.f32.xlu0 %v1079
      %v1084 = vpop.xlane.xlu0 %1083
      %1085 = vmax.xlane.f32.xlu0 %v1080
      %v1086 = vpop.xlane.xlu0 %1085
      %1087 = vmax.xlane.f32.xlu0 %v1081
      %v1088 = vpop.xlane.xlu0 %1087
      %1089 = vmax.xlane.f32.xlu0 %v1082
      %v1090 = vpop.xlane.xlu0 %1089
      %v1091 = vsub.f32 %v1079, %v1084
      %v1092 = vsub.f32 %v1080, %v1086
      %v1093 = vsub.f32 %v1081, %v1088
      %v1094 = vsub.f32 %v1082, %v1090
      %v1095 = vmul.f32 %v1091, 1.442695
      %v1096 = vpow.pop %v1095
      %v1097 = vmul.f32 %v1092, 1.442695
      %v1098 = vpow.pop %v1097
      %v1099 = vmul.f32 %v1093, 1.442695
      %v1100 = vpow.pop %v1099
      %v1101 = vmul.f32 %v1094, 1.442695
      %v1102 = vpow.pop %v1101
      %1103 = vadd.xlane.f32.xlu0 %v1096
      %v1104 = vpop.xlane.xlu0 %1103
      %1105 = vadd.xlane.f32.xlu0 %v1098
      %v1106 = vpop.xlane.xlu0 %1105
      %1107 = vadd.xlane.f32.xlu0 %v1100
      %v1108 = vpop.xlane.xlu0 %1107
      %1109 = vadd.xlane.f32.xlu0 %v1102
      %v1110 = vpop.xlane.xlu0 %1109
      %v1111 = vmul.f32 %v1096, %v1091
      %v1112 = vmul.f32 %v1098, %v1092
      %v1113 = vmul.f32 %v1100, %v1093
      %v1114 = vmul.f32 %v1102, %v1094
      %1115 = vadd.xlane.f32.xlu0 %v1111
      %v1116 = vpop.xlane.xlu0 %1115
      %1117 = vadd.xlane.f32.xlu0 %v1112
      %v1118 = vpop.xlane.xlu0 %1117
      %1119 = vadd.xlane.f32.xlu0 %v1113
      %v1120 = vpop.xlane.xlu0 %1119
      %1121 = vadd.xlane.f32.xlu0 %v1114
      %v1122 = vpop.xlane.xlu0 %1121
      %v1123 = vlog2.pop %v1104
      %v1124 = vmul.f32 %v1123, 0.6931472
      %v1125 = vlog2.pop %v1106
      %v1126 = vmul.f32 %v1125, 0.6931472
      %v1127 = vlog2.pop %v1108
      %v1128 = vmul.f32 %v1127, 0.6931472
      %v1129 = vlog2.pop %v1110
      %v1130 = vmul.f32 %v1129, 0.6931472
      %v1131 = vrcp.pop %v1104
      %v1132 = vrcp.pop %v1106
      %v1133 = vrcp.pop %v1108
      %v1134 = vrcp.pop %v1110
      %v1135 = vmul.f32 %v1131, %v1116
      %v1136 = vmul.f32 %v1132, %v1118
      %v1137 = vmul.f32 %v1133, %v1120
      %v1138 = vmul.f32 %v1134, %v1122
      %v1139 = vsub.f32 %v1124, %v1135
      %v1140 = vsub.f32 %v1126, %v1136
      %v1141 = vsub.f32 %v1128, %v1137
      %v1142 = vsub.f32 %v1130, %v1138
      %v1143 = vadd.f32 %v1139, %v1140
      %v1144 = vrot.slane %v1143, 4
      %v1145 = vadd.f32 %v1143, %v1144
      %v1146 = vrot.slane %v1145, 2
      %v1147 = vadd.f32 %v1145, %v1146
      %v1148 = vrot.slane %v1147, 1
      %v1149 = vadd.f32 %v1147, %v1148
      %v1150 = vadd.f32 %v1141, %v1142
      %v1151 = vrot.slane %v1150, 4
      %v1152 = vadd.f32 %v1150, %v1151
      %v1153 = vrot.slane %v1152, 2
      %v1154 = vadd.f32 %v1152, %v1153
      %v1155 = vrot.slane %v1154, 1
      %v1156 = vadd.f32 %v1154, %v1155
      %v1157 = vrcp.pop 16.0
      %v1158 = vmul.f32 %v1149, %v1157
      %v1159 = vmul.f32 %v1156, %v1157
      %vm1162 = vcmask 1041409
      %v1163 = vsel %vm1162, %v1159, %v1158
      %1165 = vst [vmem:[#allocation9] sm:$0x3] %v1163
    $region37: #{tpu_custom_call.1} parent=1 // pred_fallthru
      _
    // Predicated region
    $region38: #{tpu_custom_call.1} parent=1 // pred_check
      _
    $region39: #{tpu_custom_call.1} parent=1 // pred_check_branch
      %1167 = sbr.rel (0) target = $region41
    $region40: #{tpu_custom_call.1} parent=1 // pred_region
      %s1169 = ssub.s32 32, 32
      %1170 = vsyncadd [#allocation5], %s1169
      %s1172 = sshll.u32 [#allocation9], 4
      %s1173 = int_to_ptr.vmem [resolvable:$true] %s1172
      %1175 = dma.vmem_to_hbm [thread:$0]  %s1173, 32, %s4, [#allocation5]
    $region41: #{tpu_custom_call.1} parent=1 // pred_fallthru
      _
    // Predicated region
    $region42: #{tpu_custom_call.1} parent=1 // pred_check
      _
    $region43: #{tpu_custom_call.1} parent=1 // pred_check_branch
      %1177 = sbr.rel (0) target = $region45
    $region44: #{tpu_custom_call.1} parent=1 // pred_region
      %1178 = dma.done [#allocation5], 32
    $region45: #{tpu_custom_call.1} parent=1 // pred_fallthru
      _
    %1179 = vsyncpa [#allocation4], 1
    %1180 = vsyncpa [#allocation7], 1
    %1181 = vsyncpa [#allocation5], 1

</llo_original>
